<compile_context>
chip_gen: v7x
topology: tpu7x:2x2x1
jax: 0.10.0
libtpu: 0.0.40
codegen_flags: <defaults>
</compile_context>

<pallas_src>
import functools

import jax
import jax.numpy as jnp
from jax.experimental import pallas as pl
from jax.experimental.pallas import tpu as pltpu

LANES = 128


def _powf(base, expo):
    # base ** expo for base >= 0 (generic-gama fallback), safe at base == 0.
    safe = jnp.maximum(base, 1e-30)
    return jnp.where(base > 0.0, jnp.exp(expo * jnp.log(safe)), 0.0)


def _pow_gamma(a, gama):
    if gama == 2.0:
        return a * a                 # pure VPU, zero EUP
    if gama == 1.5:
        return a * jnp.sqrt(a)       # 1 EUP sqrt
    if gama == 1.0:
        return a
    if gama == 0.5:
        return jnp.sqrt(a)
    return _powf(a, gama)            # generic fallback (exp/log)


def _num_tensorcores():
    """Best-effort TensorCore-per-device count (2 on v7x/megacore, else 1)."""
    try:
        kind = jax.devices()[0].device_kind.lower()
    except Exception:
        return 1
    if "v7" in kind or "v4" in kind or "v5p" in kind:
        return 2
    return 1


def _focal_sums_kernel(x_ref, y_ref, out_ref, *, gama, eps, rows_data,
                       tail_lanes, tile_rows, strip_rows, inner, needs_mask):
    c = pl.program_id(0)   # core-split ("parallel") axis
    i = pl.program_id(1)   # streaming / reduction ("arbitrary") axis

    @pl.when(i == 0)
    def _():
        out_ref[...] = jnp.zeros_like(out_ref)

    # Logical (un-clamped) row offset of this grid step in the flat layout.
    # The DMA index_map clamps to the last physical block; the validity mask
    # below uses the logical offset so clamped duplicate blocks contribute 0.
    row_start = (c * inner + i) * tile_rows

    n_strips = tile_rows // strip_rows
    folds = strip_rows // 8

    def strip_body(s, carry):
        acc_m, acc_p, acc_n = carry
        r0 = s * strip_rows
        if not isinstance(r0, int):
            r0 = pl.multiple_of(r0, strip_rows)
        x = x_ref[pl.ds(r0, strip_rows), :].astype(jnp.float32)
        y = y_ref[pl.ds(r0, strip_rows), :].astype(jnp.float32)

        if needs_mask:
            # Per-strip remainder of real rows (local int32 scalar; never a
            # global flat element index, so no 2^31 overflow).
            rem = (rows_data - row_start) - s * strip_rows
            row_ids = jax.lax.broadcasted_iota(jnp.int32, x.shape, 0)
            valid_b = row_ids < rem
            if tail_lanes:
                lane_ids = jax.lax.broadcasted_iota(jnp.int32, x.shape, 1)
                valid_b &= jnp.logical_not(
                    (row_ids == rem - 1) & (lane_ids >= tail_lanes))
            valid = valid_b.astype(jnp.float32)
            x = jnp.where(valid_b, x, 0.0)   # sanitize stale VMEM (NaN guard)
            y = y * valid                    # masks positives and M
            w_neg = (1.0 - y) * valid        # masks negatives
        else:
            w_neg = 1.0 - y
        w_pos = y

        pos_sel = y != 0.0
        # Numerically-stable sigmoid pieces: p = sigmoid(x), q = 1 - p,
        # computed without cancellation (1 exp + 1 divide on the EUP).
        z = jnp.exp(-jnp.abs(x))             # EUP exp, z in (0, 1]
        inv = 1.0 / (1.0 + z)                # EUP divide
        zi = z * inv
        x_nonneg = x >= 0.0
        p = jnp.where(x_nonneg, inv, zi)
        q = jnp.where(x_nonneg, zi, inv)     # == 1 - p

        # Select pow-base / log-arg per element BEFORE the transcendentals:
        #   positive (y!=0): -(1-p)^g * log(p+eps)   -> a=q, b=p
        #   negative (y==0): -(p)^g   * log(1-p+eps) -> a=p, b=q
        a = jnp.where(pos_sel, q, p)
        b = jnp.where(pos_sel, p, q)
        term = -(_pow_gamma(a, gama) * jnp.log(b + eps))   # single EUP log

        def fold(v):
            # (strip_rows, 128) -> (8, 128): pure cross-vreg VPU adds, no XLU.
            return jnp.sum(v.reshape(folds, 8, LANES), axis=0)

        return (acc_m + fold(w_pos),
                acc_p + fold(term * w_pos),
                acc_n + fold(term * w_neg))

    zero = jnp.zeros((8, LANES), jnp.float32)
    init = (zero, zero, zero)
    if n_strips == 1:
        acc_m, acc_p, acc_n = strip_body(0, init)
    else:
        acc_m, acc_p, acc_n = jax.lax.fori_loop(
            0, n_strips, strip_body, init, unroll=min(n_strips, 8))

    out_ref[0, 0] += acc_m                   # M partials
    out_ref[0, 1] += acc_p                   # positive partials (unweighted)
    out_ref[0, 2] += acc_n                   # negative partials


def focal_loss_pallas(x, y, *, factor=1.0, gama=1.5, eps=1e-8,
                      tile_rows=2048, strip_rows=64, core_split=None):
    """Focal loss matching the PyTorch module forward.

    x, y: same shape (e.g. 5-D NCDHW).  Inputs stream in their native dtype
    (f32 / bf16 x, f32 / int8 / bool y) and are cast to f32 in-kernel.
    """
    assert x.shape == y.shape
    total = int(x.size)
    assert total > 0

    if core_split is None:
        core_split = _num_tensorcores()
    core_split = max(1, int(core_split))

    tail_lanes = total % LANES
    rows_data = -(-total // LANES)                 # rows holding real data

    tile_rows = max(8, (int(tile_rows) // 8) * 8)
    strip_rows = max(8, (int(strip_rows) // 8) * 8)
    strip_rows = min(strip_rows, tile_rows)

    rows_phys_min = ((rows_data + 7) // 8) * 8     # smallest 8-aligned layout
    if rows_phys_min >= tile_rows:
        # Large array: fixed big streaming tile; no row padding of the layout
        # (Pallas's partial last-block DMA + in-kernel mask handle the tail).
        strip = strip_rows
        tr = max(strip, (tile_rows // strip) * strip)
        rows_phys = rows_data
    else:
        # Small array: round the layout up to 8 rows so block / fold shapes
        # stay (8,128)-aligned (pad cost negligible at this size).
        rows_phys = rows_phys_min
        tr = rows_phys
        strip = min(strip_rows, tr)
        while tr % strip:
            strip -= 8

    nblocks = -(-rows_phys // tr)
    inner = -(-nblocks // core_split)
    covered_rows = core_split * inner * tr
    needs_mask = (tail_lanes != 0) or (covered_rows != rows_data)

    padded_total = rows_phys * LANES

    def flat(a):
        f = a.reshape(-1)                          # native dtype, zero-copy
        if padded_total != total:
            # Only hit when total % 128 != 0 or the array is tiny.
            # TODO(synk): for huge arrays whose size isn't a multiple of 128
            # this still makes one padded copy; a manual-DMA tail would fix it.
            f = jnp.pad(f, (0, padded_total - total))
        return f.reshape(rows_phys, LANES)

    xf = flat(x)
    yf = flat(y)

    kernel = functools.partial(
        _focal_sums_kernel, gama=float(gama), eps=float(eps),
        rows_data=rows_data, tail_lanes=tail_lanes, tile_rows=tr,
        strip_rows=strip, inner=inner, needs_mask=needs_mask)

    last_block = nblocks - 1

    def in_map(c, i):
        # Clamp so the DMA never starts past the array; clamped duplicates
        # are zeroed by the in-kernel validity mask (which uses the
        # un-clamped logical block index).
        return (jnp.minimum(c * inner + i, last_block), 0)

    partials = pl.pallas_call(
        kernel,
        out_shape=jax.ShapeDtypeStruct((core_split, 3, 8, LANES), jnp.float32),
        grid_spec=pltpu.PrefetchScalarGridSpec(
            num_scalar_prefetch=0,
            grid=(core_split, inner),
            in_specs=[
                pl.BlockSpec((tr, LANES), in_map),
                pl.BlockSpec((tr, LANES), in_map),
            ],
            out_specs=pl.BlockSpec((1, 3, 8, LANES),
                                   lambda c, i: (c, 0, 0, 0)),
        ),
        # Reduction axis stays "arbitrary"; the leading "parallel" axis only
        # has extent > 1 on multi-TensorCore chips (v7x / megacore).
        # VMEM use (2 streams x 2 bufs x <= 1 MiB + strip temps) is far below
        # the default scoped limits on all generations.
        compiler_params=pltpu.CompilerParams(
            dimension_semantics=("parallel", "arbitrary")),
    )(xf, yf)

    sums = jnp.sum(partials, axis=(0, 2, 3))       # tiny (3,) final reduce
    M, s_pos, s_neg = sums[0], sums[1], sums[2]
    Nf = jnp.float32(total)

    # NOTE: M == 0 yields inf/nan, identical to the reference module behavior.
    positive_loss = ((Nf - M) / M) * s_pos
    loss = factor * positive_loss + (2.0 - factor) * s_neg
    return loss / Nf


def focal_loss_ref(x, y, *, factor=1.0, gama=1.5, eps=1e-8):
    """Pure-JAX reference with identical semantics (for verification)."""
    x = x.astype(jnp.float32)
    y = y.astype(jnp.float32)
    p = jax.nn.sigmoid(x)
    N = jnp.float32(x.size)
    M = jnp.sum(y)
    pos_term = -((1.0 - p) ** gama) * jnp.log(p + eps)
    neg_term = -(p ** gama) * jnp.log((1.0 - p) + eps)
    s_pos = jnp.sum(jnp.where(y != 0.0, pos_term, 0.0))
    s_neg = jnp.sum(jnp.where((1.0 - y) != 0.0, neg_term, 0.0))
    positive_loss = ((N - M) / M) * s_pos
    loss = factor * positive_loss + (2.0 - factor) * s_neg
    return loss / N


if __name__ == "__main__":
    key = jax.random.PRNGKey(0)

    # Small 5-D shapes consistent with the module's 5-index gather (B,C,D,H,W).
    cases = [
        ((2, 2, 4, 8, 16), {}),                               # fully aligned
        ((2, 2, 3, 8, 15), {}),                               # 128-ragged tail (lane mask)
        ((2, 2, 5, 8, 16), {"tile_rows": 8}),                 # partial row block (row mask)
        ((2, 2, 4, 8, 16), {"tile_rows": 16, "strip_rows": 8}),  # multi-strip loop
    ]
    for idx, (shape, kw) in enumerate(cases):
        kx, ky = jax.random.split(jax.random.fold_in(key, idx))
        x = jax.random.normal(kx, shape, dtype=jnp.float32)
        y = (jax.random.uniform(ky, shape) < 0.3).astype(jnp.float32)
        # guarantee at least one positive so M > 0 (as the original loss assumes)
        y = y.reshape(-1).at[0].set(1.0).reshape(shape)

        out = focal_loss_pallas(x, y, factor=1.0, gama=1.5, eps=1e-8, **kw)
        out = jax.block_until_ready(out)
        ref = focal_loss_ref(x, y, factor=1.0, gama=1.5, eps=1e-8)

        assert jnp.isfinite(out), f"non-finite loss for shape {shape}"
        err = abs(float(out) - float(ref))
        assert err <= 1e-3 * max(1.0, abs(float(ref))), (
            f"mismatch for {shape} {kw}: pallas={float(out)} ref={float(ref)}"
        )
    print("KERNEL_OK")
</pallas_src>

<mosaic_0001>
module attributes {stable_mosaic.version = 11 : i64} {
  func.func @_focal_sums_kernel(%arg0: i32, %arg1: i32, %arg2: memref<16x128xf32, #tpu.memory_space<vmem>>, %arg3: memref<16x128xf32, #tpu.memory_space<vmem>>, %arg4: memref<1x3x8x128xf32, #tpu.memory_space<vmem>>) attributes {dimension_semantics = [#tpu.dimension_semantics<parallel>, #tpu.dimension_semantics<arbitrary>], iteration_bounds = array<i64: 1, 1>, scalar_prefetch = 0 : i64, scratch_operands = 0 : i64, tpu.core_type = #tpu.core_type<tc>, window_params = [{transform_indices = @transform_0, window_bounds = array<i64: 16, 128>}, {transform_indices = @transform_1, window_bounds = array<i64: 16, 128>}, {transform_indices = @transform_2, window_bounds = array<i64: 1, 3, 8, 128>}]} {
    %c0_i32 = arith.constant 0 : i32
    %0 = arith.cmpi eq, %arg1, %c0_i32 : i32
    %1 = arith.extui %0 : i1 to i32
    %c0_i32_0 = arith.constant 0 : i32
    %2 = arith.cmpi ne, %1, %c0_i32_0 : i32
    scf.if %2 {
      %cst_37 = arith.constant 0.000000e+00 : f32
      %62 = vector.broadcast %cst_37 : f32 to vector<1x3x8x128xf32>
      %c0_38 = arith.constant 0 : index
      %c0_39 = arith.constant 0 : index
      %c0_40 = arith.constant 0 : index
      %c0_41 = arith.constant 0 : index
      %63 = vector.load %arg4[%c0_38, %c0_39, %c0_40, %c0_41] : memref<1x3x8x128xf32, #tpu.memory_space<vmem>>, vector<1x3x8x128xf32>
      tpu.vector_store %arg4[%c0_38, %c0_39, %c0_40, %c0_41], %62 {strides = array<i32>} : memref<1x3x8x128xf32, #tpu.memory_space<vmem>>, vector<1x3x8x128xf32>,
    } else {
    }
    %cst = arith.constant 0.000000e+00 : f32
    %3 = vector.broadcast %cst : f32 to vector<8x128xf32>
    %c0 = arith.constant 0 : index
    %c0_1 = arith.constant 0 : index
    %4 = vector.load %arg2[%c0, %c0_1] : memref<16x128xf32, #tpu.memory_space<vmem>>, vector<16x128xf32>
    %c0_2 = arith.constant 0 : index
    %c0_3 = arith.constant 0 : index
    %5 = vector.load %arg3[%c0_2, %c0_3] : memref<16x128xf32, #tpu.memory_space<vmem>>, vector<16x128xf32>
    %cst_4 = arith.constant 1.000000e+00 : f32
    %6 = vector.broadcast %cst_4 : f32 to vector<16x128xf32>
    %7 = arith.subf %6, %5 : vector<16x128xf32>
    %cst_5 = arith.constant 0.000000e+00 : f32
    %8 = vector.broadcast %cst_5 : f32 to vector<16x128xf32>
    %9 = arith.cmpf one, %5, %8 : vector<16x128xf32>
    %10 = math.absf %4 : vector<16x128xf32>
    %cst_6 = arith.constant 0.000000e+00 : f32
    %11 = vector.broadcast %cst_6 : f32 to vector<16x128xf32>
    %12 = arith.subf %11, %10 : vector<16x128xf32>
    %13 = math.exp %12 : vector<16x128xf32>
    %cst_7 = arith.constant 1.000000e+00 : f32
    %14 = vector.broadcast %cst_7 : f32 to vector<16x128xf32>
    %15 = arith.addf %14, %13 : vector<16x128xf32>
    %cst_8 = arith.constant 1.000000e+00 : f32
    %16 = vector.broadcast %cst_8 : f32 to vector<16x128xf32>
    %17 = arith.divf %16, %15 : vector<16x128xf32>
    %18 = arith.mulf %13, %17 : vector<16x128xf32>
    %cst_9 = arith.constant 0.000000e+00 : f32
    %19 = vector.broadcast %cst_9 : f32 to vector<16x128xf32>
    %20 = arith.cmpf oge, %4, %19 : vector<16x128xf32>
    %21 = arith.select %20, %17, %18 : vector<16x128xi1>, vector<16x128xf32>
    %22 = arith.select %20, %18, %17 : vector<16x128xi1>, vector<16x128xf32>
    %23 = arith.select %9, %22, %21 : vector<16x128xi1>, vector<16x128xf32>
    %24 = arith.select %9, %21, %22 : vector<16x128xi1>, vector<16x128xf32>
    %25 = math.sqrt %23 : vector<16x128xf32>
    %26 = arith.mulf %23, %25 : vector<16x128xf32>
    %cst_10 = arith.constant 9.99999993E-9 : f32
    %27 = vector.broadcast %cst_10 : f32 to vector<16x128xf32>
    %28 = arith.addf %24, %27 : vector<16x128xf32>
    %29 = math.log %28 : vector<16x128xf32>
    %30 = arith.mulf %26, %29 : vector<16x128xf32>
    %cst_11 = arith.constant 0.000000e+00 : f32
    %31 = vector.broadcast %cst_11 : f32 to vector<16x128xf32>
    %32 = arith.subf %31, %30 : vector<16x128xf32>
    %33 = vector.shape_cast %5 : vector<16x128xf32> to vector<2x8x128xf32>
    %cst_12 = arith.constant dense<0.000000e+00> : vector<8x128xf32>
    %34 = vector.multi_reduction <add>, %33, %cst_12 [0] : vector<2x8x128xf32> to vector<8x128xf32>
    %35 = arith.addf %3, %34 : vector<8x128xf32>
    %36 = arith.mulf %32, %5 : vector<16x128xf32>
    %37 = vector.shape_cast %36 : vector<16x128xf32> to vector<2x8x128xf32>
    %cst_13 = arith.constant dense<0.000000e+00> : vector<8x128xf32>
    %38 = vector.multi_reduction <add>, %37, %cst_13 [0] : vector<2x8x128xf32> to vector<8x128xf32>
    %39 = arith.addf %3, %38 : vector<8x128xf32>
    %40 = arith.mulf %32, %7 : vector<16x128xf32>
    %41 = vector.shape_cast %40 : vector<16x128xf32> to vector<2x8x128xf32>
    %cst_14 = arith.constant dense<0.000000e+00> : vector<8x128xf32>
    %42 = vector.multi_reduction <add>, %41, %cst_14 [0] : vector<2x8x128xf32> to vector<8x128xf32>
    %43 = arith.addf %3, %42 : vector<8x128xf32>
    %c0_15 = arith.constant 0 : index
    %c0_16 = arith.constant 0 : index
    %c0_17 = arith.constant 0 : index
    %c0_18 = arith.constant 0 : index
    %44 = vector.load %arg4[%c0_15, %c0_16, %c0_17, %c0_18] : memref<1x3x8x128xf32, #tpu.memory_space<vmem>>, vector<1x1x8x128xf32>
    %45 = vector.shape_cast %44 : vector<1x1x8x128xf32> to vector<8x128xf32>
    %46 = arith.addf %45, %35 : vector<8x128xf32>
    %c0_19 = arith.constant 0 : index
    %c0_20 = arith.constant 0 : index
    %c0_21 = arith.constant 0 : index
    %c0_22 = arith.constant 0 : index
    %47 = vector.load %arg4[%c0_19, %c0_20, %c0_21, %c0_22] : memref<1x3x8x128xf32, #tpu.memory_space<vmem>>, vector<1x1x8x128xf32>
    %48 = vector.shape_cast %47 : vector<1x1x8x128xf32> to vector<8x128xf32>
    %49 = vector.shape_cast %46 : vector<8x128xf32> to vector<1x1x8x128xf32>
    tpu.vector_store %arg4[%c0_19, %c0_20, %c0_21, %c0_22], %49 {strides = array<i32>} : memref<1x3x8x128xf32, #tpu.memory_space<vmem>>, vector<1x1x8x128xf32>,
    %c0_23 = arith.constant 0 : index
    %c1 = arith.constant 1 : index
    %c0_24 = arith.constant 0 : index
    %c0_25 = arith.constant 0 : index
    %50 = vector.load %arg4[%c0_23, %c1, %c0_24, %c0_25] : memref<1x3x8x128xf32, #tpu.memory_space<vmem>>, vector<1x1x8x128xf32>
    %51 = vector.shape_cast %50 : vector<1x1x8x128xf32> to vector<8x128xf32>
    %52 = arith.addf %51, %39 : vector<8x128xf32>
    %c0_26 = arith.constant 0 : index
    %c1_27 = arith.constant 1 : index
    %c0_28 = arith.constant 0 : index
    %c0_29 = arith.constant 0 : index
    %53 = vector.load %arg4[%c0_26, %c1_27, %c0_28, %c0_29] : memref<1x3x8x128xf32, #tpu.memory_space<vmem>>, vector<1x1x8x128xf32>
    %54 = vector.shape_cast %53 : vector<1x1x8x128xf32> to vector<8x128xf32>
    %55 = vector.shape_cast %52 : vector<8x128xf32> to vector<1x1x8x128xf32>
    tpu.vector_store %arg4[%c0_26, %c1_27, %c0_28, %c0_29], %55 {strides = array<i32>} : memref<1x3x8x128xf32, #tpu.memory_space<vmem>>, vector<1x1x8x128xf32>,
    %c0_30 = arith.constant 0 : index
    %c2 = arith.constant 2 : index
    %c0_31 = arith.constant 0 : index
    %c0_32 = arith.constant 0 : index
    %56 = vector.load %arg4[%c0_30, %c2, %c0_31, %c0_32] : memref<1x3x8x128xf32, #tpu.memory_space<vmem>>, vector<1x1x8x128xf32>
    %57 = vector.shape_cast %56 : vector<1x1x8x128xf32> to vector<8x128xf32>
    %58 = arith.addf %57, %43 : vector<8x128xf32>
    %c0_33 = arith.constant 0 : index
    %c2_34 = arith.constant 2 : index
    %c0_35 = arith.constant 0 : index
    %c0_36 = arith.constant 0 : index
    %59 = vector.load %arg4[%c0_33, %c2_34, %c0_35, %c0_36] : memref<1x3x8x128xf32, #tpu.memory_space<vmem>>, vector<1x1x8x128xf32>
    %60 = vector.shape_cast %59 : vector<1x1x8x128xf32> to vector<8x128xf32>
    %61 = vector.shape_cast %58 : vector<8x128xf32> to vector<1x1x8x128xf32>
    tpu.vector_store %arg4[%c0_33, %c2_34, %c0_35, %c0_36], %61 {strides = array<i32>} : memref<1x3x8x128xf32, #tpu.memory_space<vmem>>, vector<1x1x8x128xf32>,
    return
  }
  func.func @transform_0(%arg0: i32, %arg1: i32) -> (i32, i32) {
    %c1_i32 = arith.constant 1 : i32
    %0 = arith.muli %arg0, %c1_i32 : i32
    %1 = arith.addi %0, %arg1 : i32
    %c0_i32 = arith.constant 0 : i32
    %2 = arith.minsi %1, %c0_i32 : i32
    %c0_i32_0 = arith.constant 0 : i32
    %c0_i32_1 = arith.constant 0 : i32
    return %2, %c0_i32_0 : i32, i32
  }
  func.func @transform_1(%arg0: i32, %arg1: i32) -> (i32, i32) {
    %c1_i32 = arith.constant 1 : i32
    %0 = arith.muli %arg0, %c1_i32 : i32
    %1 = arith.addi %0, %arg1 : i32
    %c0_i32 = arith.constant 0 : i32
    %2 = arith.minsi %1, %c0_i32 : i32
    %c0_i32_0 = arith.constant 0 : i32
    %c0_i32_1 = arith.constant 0 : i32
    return %2, %c0_i32_0 : i32, i32
  }
  func.func @transform_2(%arg0: i32, %arg1: i32) -> (i32, i32, i32, i32) {
    %c0_i32 = arith.constant 0 : i32
    %c0_i32_0 = arith.constant 0 : i32
    %c0_i32_1 = arith.constant 0 : i32
    %c0_i32_2 = arith.constant 0 : i32
    return %arg0, %c0_i32, %c0_i32_0, %c0_i32_1 : i32, i32, i32, i32
  }
}

</mosaic_0001>

<llo_original>
// kernel: tpu_custom_call.1
$region0: #{tpu_custom_call.1}
  #allocation0 [shape = 'u32[]', space=smem, size = 0x4, offset = 0x4, fixed_abs, tag = 'smem constant byte address 0x4 - core index']
  #allocation1 [shape = 'u32[144,128]{1,0:T(1,128)}', space=vmem, size = 0x12000, scoped, tag = 'internal scratch']
  %s0 = inlined_call_operand.hbm [shape: f32[16,128], index: 0, kind: input, shape index: {}]
  %s1 = inlined_call_operand.hbm [shape: f32[16,128], index: 1, kind: input, shape index: {}]
  %s2 = inlined_call_operand.hbm [shape: f32[1,3,8,128], index: 2, kind: output, shape index: {}]
  %s3 = sld [smem:[#allocation0]]
  $region30: #{tpu_custom_call.1} parent=0
    _
  %s5 = ssub.s32 1, %s3
  %s6 = scalar_select 0, %s5, %s3
  $region1: #{tpu_custom_call.1} parent=0
    #allocation2 [shape = 'u8[8192]{0}', space=vmem, size = 0x2000, scoped, tag = 'input window, operand 0, single buffered']
    #allocation3 [shape = 's32[1]{0}', space=sflag, size = 0x4, scoped, tag = 'scoped memory for tpu_custom_call.1']
    #allocation4 [shape = 's32[1]{0}', space=sflag, size = 0x4, scoped, tag = 'scoped memory for tpu_custom_call.1']
    #allocation5 [shape = 'u8[8192]{0}', space=vmem, size = 0x2000, scoped, tag = 'input window, operand 1, single buffered']
    #allocation6 [shape = 's32[1]{0}', space=sflag, size = 0x4, scoped, tag = 'scoped memory for tpu_custom_call.1']
    #allocation7 [shape = 'u8[12288]{0}', space=vmem, size = 0x3000, scoped, tag = 'output window, operand 0, single buffered']
    %7 = vsyncpa [#allocation3], 0
    %8 = vsyncpa [#allocation6], 0
    %9 = vsyncpa [#allocation4], 0
    // Predicated region
    $region2: #{tpu_custom_call.1} parent=1 // pred_check
      _
    $region3: #{tpu_custom_call.1} parent=1 // pred_check_branch
      %11 = sbr.rel (0) target = $region5
    $region4: #{tpu_custom_call.1} parent=1 // pred_region
      %s12 = sadd.s32 0, 0
      %p13 = scmp.lt.s32.totalorder %s12, 0
      %s14 = scalar_select %p13, %s12, 0
      %s15 = smul.u32 2, %s14
      %s17 = ssub.s32 256, 256
      %18 = vsyncadd [#allocation3], %s17
      %s19 = smul.addr %s15, 128
      %s20 = scalar_lea.hbm %s0, %s19
      %s21 = sshll.u32 [#allocation2], 4
      %s22 = int_to_ptr.vmem [resolvable:$true] %s21
      %27 = dma.hbm_to_vmem [thread:$0]  %s20, 256, %s22, [#allocation3], 128, 128, 8
    $region5: #{tpu_custom_call.1} parent=1 // pred_fallthru
      _
    // Predicated region
    $region6: #{tpu_custom_call.1} parent=1 // pred_check
      _
    $region7: #{tpu_custom_call.1} parent=1 // pred_check_branch
      %29 = sbr.rel (0) target = $region9
    $region8: #{tpu_custom_call.1} parent=1 // pred_region
      %s30 = sadd.s32 0, 0
      %p31 = scmp.lt.s32.totalorder %s30, 0
      %s32 = scalar_select %p31, %s30, 0
      %s33 = smul.u32 2, %s32
      %s35 = ssub.s32 256, 256
      %36 = vsyncadd [#allocation6], %s35
      %s37 = smul.addr %s33, 128
      %s38 = scalar_lea.hbm %s1, %s37
      %s39 = sshll.u32 [#allocation5], 4
      %s40 = int_to_ptr.vmem [resolvable:$true] %s39
      %45 = dma.hbm_to_vmem [thread:$0]  %s38, 256, %s40, [#allocation6], 128, 128, 8
    $region9: #{tpu_custom_call.1} parent=1 // pred_fallthru
      _
    // Predicated region
    $region10: #{tpu_custom_call.1} parent=1 // pred_check
      _
    $region11: #{tpu_custom_call.1} parent=1 // pred_check_branch
      %47 = sbr.rel (0) target = $region13
    $region12: #{tpu_custom_call.1} parent=1 // pred_region
      %48 = dma.done [#allocation3], 256
    $region13: #{tpu_custom_call.1} parent=1 // pred_fallthru
      _
    // Predicated region
    $region14: #{tpu_custom_call.1} parent=1 // pred_check
      _
    $region15: #{tpu_custom_call.1} parent=1 // pred_check_branch
      %50 = sbr.rel (0) target = $region17
    $region16: #{tpu_custom_call.1} parent=1 // pred_region
      %51 = dma.done [#allocation6], 256
    $region17: #{tpu_custom_call.1} parent=1 // pred_fallthru
      _
    %s52 = sadd.s32 0, 0
    %p53 = scmp.lt.s32.totalorder %s52, 0
    %s54 = scalar_select %p53, %s52, 0
    %s55 = smul.u32 2, %s54
    %s56 = sadd.s32 0, 0
    %p57 = scmp.lt.s32.totalorder %s56, 0
    %s58 = scalar_select %p57, %s56, 0
    %s59 = smul.u32 2, %s58
    %p60 = scmp.eq.s32.totalorder 0, 0
    // Predicated region
    $region18: #{tpu_custom_call.1} parent=1 // pred_check
      %p61 = pneg %p60
    $region19: #{tpu_custom_call.1} parent=1 // pred_check_branch
      %63 = sbr.rel (%p61) target = $region21
    $region20: #{tpu_custom_call.1} parent=1 // pred_region
      %64 = vst [vmem:[#allocation7] sm:$0xff] 0.0
      %65 = vst [vmem:[#allocation7 + $0x8] sm:$0xff] 0.0
      %66 = vst [vmem:[#allocation7 + $0x10] sm:$0xff] 0.0
    $region21: #{tpu_custom_call.1} parent=1 // pred_fallthru
      _
    %v67 = vld [vmem:[#allocation2] sm:$0xff]
    %v68 = vld [vmem:[#allocation2 + $0x8] sm:$0xff]
    %v69 = vld [vmem:[#allocation5] sm:$0xff]
    %v70 = vld [vmem:[#allocation5 + $0x8] sm:$0xff]
    %v71 = vsub.f32 1.0, %v69
    %v72 = vsub.f32 1.0, %v70
    %vm73 = vcmp.ne.f32.partialorder %v69, 0.0
    %vm74 = vcmp.ne.f32.partialorder %v70, 0.0
    %v75 = vand.u32 2147483647, %v67
    %v76 = vand.u32 2147483647, %v68
    %v77 = vsub.f32 0.0, %v75
    %v78 = vsub.f32 0.0, %v76
    %v79 = vmul.f32 %v77, 1.442695
    %v80 = vpow.pop %v79
    %v81 = vmul.f32 %v78, 1.442695
    %v82 = vpow.pop %v81
    %v83 = vadd.f32 %v80, 1.0
    %v84 = vadd.f32 %v82, 1.0
    %v85 = vrcp.pop %v83
    %v86 = vmul.f32 1.0, %v85
    %v87 = vrcp.pop %v84
    %v88 = vmul.f32 1.0, %v87
    %v89 = vmul.f32 %v80, %v86
    %v90 = vmul.f32 %v82, %v88
    %vm91 = vcmp.ge.f32.partialorder %v67, 0.0
    %vm92 = vcmp.ge.f32.partialorder %v68, 0.0
    %v93 = vsel %vm91, %v86, %v89
    %v94 = vsel %vm92, %v88, %v90
    %v95 = vsel %vm91, %v89, %v86
    %v96 = vsel %vm92, %v90, %v88
    %v97 = vsel %vm73, %v95, %v93
    %v98 = vsel %vm74, %v96, %v94
    %v99 = vsel %vm73, %v93, %v95
    %v100 = vsel %vm74, %v94, %v96
    %v101 = vrsqrt.pop %v97
    %v102 = vmul.f32 %v97, %v101
    %vm103 = vcmp.eq.f32.partialorder %v97, inf
    %v104 = vsel %vm103, %v97, %v102
    %vm105 = vcmp.eq.f32.partialorder %v97, 0.0
    %v106 = vand.u32 %v97, 2147483648
    %v107 = vsel %vm105, %v106, %v104
    %v108 = vrsqrt.pop %v98
    %v109 = vmul.f32 %v98, %v108
    %vm110 = vcmp.eq.f32.partialorder %v98, inf
    %v111 = vsel %vm110, %v98, %v109
    %vm112 = vcmp.eq.f32.partialorder %v98, 0.0
    %v113 = vand.u32 %v98, 2147483648
    %v114 = vsel %vm112, %v113, %v111
    %v115 = vmul.f32 %v97, %v107
    %v116 = vmul.f32 %v98, %v114
    %v117 = vadd.f32 %v99, 1e-08
    %v118 = vadd.f32 %v100, 1e-08
    %v119 = vlog2.pop %v117
    %v120 = vmul.f32 %v119, 0.6931472
    %v121 = vlog2.pop %v118
    %v122 = vmul.f32 %v121, 0.6931472
    %v123 = vmul.f32 %v115, %v120
    %v124 = vmul.f32 %v116, %v122
    %v125 = vsub.f32 0.0, %v123
    %v126 = vsub.f32 0.0, %v124
    %v127 = vadd.f32 %v69, %v70
    %v128 = vadd.f32 %v127, 0.0
    %v129 = vmul.f32 %v125, %v69
    %v130 = vmul.f32 %v126, %v70
    %v131 = vadd.f32 %v129, %v130
    %v132 = vadd.f32 %v131, 0.0
    %v133 = vmul.f32 %v125, %v71
    %v134 = vmul.f32 %v126, %v72
    %v135 = vadd.f32 %v133, %v134
    %v136 = vadd.f32 %v135, 0.0
    %v137 = vld [vmem:[#allocation7] sm:$0xff]
    %v138 = vadd.f32 %v137, %v128
    %139 = vst [vmem:[#allocation7] sm:$0xff] %v138
    %s140 = scalar_lea.vmem [#allocation7], 8
    %v141 = vld [vmem:[%s140] sm:$0xff]
    %v142 = vadd.f32 %v141, %v132
    %143 = vst [vmem:[%s140] sm:$0xff] %v142
    %s144 = scalar_lea.vmem [#allocation7], 16
    %v145 = vld [vmem:[%s144] sm:$0xff]
    %v146 = vadd.f32 %v145, %v136
    %147 = vst [vmem:[%s144] sm:$0xff] %v146
    // Predicated region
    $region22: #{tpu_custom_call.1} parent=1 // pred_check
      _
    $region23: #{tpu_custom_call.1} parent=1 // pred_check_branch
      %149 = sbr.rel (0) target = $region25
    $region24: #{tpu_custom_call.1} parent=1 // pred_region
      %s151 = ssub.s32 384, 384
      %152 = vsyncadd [#allocation4], %s151
      %s153 = sshll.u32 [#allocation7], 4
      %s154 = int_to_ptr.vmem [resolvable:$true] %s153
      %159 = dma.vmem_to_hbm [thread:$0]  %s154, 384, %s2, [#allocation4], 128, 128, 8
    $region25: #{tpu_custom_call.1} parent=1 // pred_fallthru
      _
    // Predicated region
    $region26: #{tpu_custom_call.1} parent=1 // pred_check
      _
    $region27: #{tpu_custom_call.1} parent=1 // pred_check_branch
      %161 = sbr.rel (0) target = $region29
    $region28: #{tpu_custom_call.1} parent=1 // pred_region
      %162 = dma.done [#allocation4], 384
    $region29: #{tpu_custom_call.1} parent=1 // pred_fallthru
      _
    %163 = vsyncpa [#allocation3], 1
    %164 = vsyncpa [#allocation6], 1
    %165 = vsyncpa [#allocation4], 1

</llo_original>
